<compile_context>
chip_gen: v7x
topology: tpu7x:2x2x1
jax: 0.10.0
libtpu: 0.0.40
codegen_flags: <defaults>
</compile_context>

<pallas_src>
import jax
import jax.numpy as jnp
from jax.experimental import pallas as pl
from jax.experimental.pallas import tpu as pltpu

# Static corner matrix from the PyTorch module's registered buffer.
CORNER_MATRIX = (
    (-1, -1, -1), (1, -1, -1), (1, 1, -1), (1, 1, 1),
    (1, -1, 1), (-1, -1, 1), (-1, 1, 1), (-1, 1, -1),
)


def _round_up(v, m):
    return ((v + m - 1) // m) * m


def _bbox3d_projector_kernel(bbox_ref, p2_ref, abs_ref, homo_ref, theta_ref):
    tile = bbox_ref.shape[1]

    # Per-field (1, TILE) rows; boxes along lanes.
    x1 = bbox_ref[0:1, :]
    y1 = bbox_ref[1:2, :]
    z1 = bbox_ref[2:3, :]
    hw = 0.5 * bbox_ref[3:4, :]     # 0.5 * w
    hh = 0.5 * bbox_ref[4:5, :]     # 0.5 * h
    hl = 0.5 * bbox_ref[5:6, :]     # 0.5 * l
    alpha = bbox_ref[6:7, :]

    # P2 scalars from SMEM (3x4 is far below MXU granularity -> scalar path).
    p00 = p2_ref[0, 0]; p01 = p2_ref[0, 1]; p02 = p2_ref[0, 2]; p03 = p2_ref[0, 3]
    p10 = p2_ref[1, 0]; p11 = p2_ref[1, 1]; p12 = p2_ref[1, 2]; p13 = p2_ref[1, 3]
    p20 = p2_ref[2, 0]; p21 = p2_ref[2, 1]; p22 = p2_ref[2, 2]; p23 = p2_ref[2, 3]

    # alpha2theta_3d: theta = alpha + atan2(x + P2[0,3]/P2[0,0], z)
    theta = alpha + jnp.arctan2(x1 + p03 / p00, z1)   # (1, TILE)
    c = jnp.cos(theta)
    s = jnp.sin(theta)

    # Hoist every (1,TILE) -> (8,TILE) broadcast exactly once (JAX does not
    # CSE broadcast_in_dim; mixed-shape binary ops would re-emit it).
    shape8 = (8, tile)
    x = jnp.broadcast_to(x1, shape8)
    y = jnp.broadcast_to(y1, shape8)
    z = jnp.broadcast_to(z1, shape8)
    hh_b = jnp.broadcast_to(hh, shape8)
    hl_c = jnp.broadcast_to(hl * c, shape8)
    hl_s = jnp.broadcast_to(hl * s, shape8)
    hw_c = jnp.broadcast_to(hw * c, shape8)
    hw_s = jnp.broadcast_to(hw * s, shape8)

    # Corner sign planes built directly at (8, TILE); corners on sublanes.
    # From CORNER_MATRIX:
    #   sx = [-1, 1, 1, 1, 1,-1,-1,-1]  -> +1 for corners 1..4
    #   sy = [-1,-1, 1, 1,-1,-1, 1, 1]  -> +1 when (corner & 2) != 0
    #   sz = [-1,-1,-1, 1, 1, 1, 1,-1]  -> +1 for corners 3..6
    corner = jax.lax.broadcasted_iota(jnp.int32, shape8, 0)
    one = jnp.float32(1.0)
    neg = jnp.float32(-1.0)
    sx = jnp.where((corner >= 1) & (corner <= 4), one, neg)
    sy = jnp.where((corner & 2) != 0, one, neg)
    sz = jnp.where((corner >= 3) & (corner <= 6), one, neg)

    # Absolute corners, all 8 at once: (8, TILE).
    #   rot_x = sz*hl*c + sx*hw*s ; rot_z = -sz*hl*s + sx*hw*c
    ax = x + sz * hl_c + sx * hw_s
    ay = y + sy * hh_b
    az = z - sz * hl_s + sx * hw_c
    abs_ref[0, :, :] = ax
    abs_ref[1, :, :] = ay
    abs_ref[2, :, :] = az

    # camera_coord = P2 @ [ax, ay, az, 1]^T, computed directly from the
    # materialized corner planes (scalar splats only, no broadcasts).
    cam0 = p00 * ax + p01 * ay + p02 * az + p03
    cam1 = p10 * ax + p11 * ay + p12 * az + p13
    cam2 = p20 * ax + p21 * ay + p22 * az + p23

    # EUP approx reciprocal + one Newton-Raphson step (full f32 precision),
    # then three multiplies instead of three divides.
    d = cam2 + 1e-6
    inv = pl.reciprocal(d, approx=True)
    inv = inv * (2.0 - d * inv)
    homo_ref[0, :, :] = cam0 * inv
    homo_ref[1, :, :] = cam1 * inv
    homo_ref[2, :, :] = cam2 * inv

    theta_ref[...] = theta


def bbox3d_projector(bbox_3d, tensor_p2, max_tile=16384, transpose_outputs=True):
    """bbox_3d: [N, 7] (x, y, z, w, h, l, alpha); tensor_p2: [3, 4].

    transpose_outputs=True  -> (abs [N,8,3], homo [N,8,3], thetas [N])  (torch contract)
    transpose_outputs=False -> (abs [3,8,N], homo [3,8,N], thetas [N])  (lane-dense,
                                skips the HBM-doubling wrapper transposes)
    """
    N = int(bbox_3d.shape[0])
    lanes = _round_up(max(N, 1), 128)
    tile = min(int(max_tile), lanes)
    # Ensure >= 2 grid steps along the "parallel" axis when there is enough
    # work, so both v7x TensorCores are used (harmless elsewhere).
    if lanes >= 256 and tile >= lanes:
        tile = _round_up(lanes // 2, 128)
    n_p = _round_up(lanes, tile)
    grid = (n_p // tile,)

    bbox_t = jnp.zeros((8, n_p), jnp.float32)
    bbox_t = bbox_t.at[:7, :N].set(bbox_3d.T.astype(jnp.float32))
    p2 = tensor_p2.astype(jnp.float32)

    out_shapes = (
        jax.ShapeDtypeStruct((3, 8, n_p), jnp.float32),   # abs corners
        jax.ShapeDtypeStruct((3, 8, n_p), jnp.float32),   # homo coords
        jax.ShapeDtypeStruct((1, n_p), jnp.float32),      # thetas
    )
    cost = pl.CostEstimate(
        flops=int(320 * n_p),
        transcendentals=int(4 * n_p),
        bytes_accessed=int(228 * n_p),
    )
    abs_o, homo_o, theta_o = pl.pallas_call(
        _bbox3d_projector_kernel,
        out_shape=out_shapes,
        grid=grid,
        in_specs=[
            pl.BlockSpec((8, tile), lambda i: (0, i)),    # bbox tile (VMEM)
            pl.BlockSpec(memory_space=pltpu.SMEM),        # P2 scalars
        ],
        out_specs=(
            pl.BlockSpec((3, 8, tile), lambda i: (0, 0, i)),
            pl.BlockSpec((3, 8, tile), lambda i: (0, 0, i)),
            pl.BlockSpec((1, tile), lambda i: (0, i)),
        ),
        compiler_params=pltpu.CompilerParams(
            dimension_semantics=("parallel",)),
        cost_estimate=cost,
    )(bbox_t, p2)

    thetas = theta_o[0, :N]
    if not transpose_outputs:
        # TODO(synk): downstream consumers that accept [coord, corner, box]
        # layout avoid the HBM round-trip of the (2,1,0) transposes.
        return abs_o[:, :, :N], homo_o[:, :, :N], thetas

    abs_corners = jnp.transpose(abs_o[:, :, :N], (2, 1, 0))   # (N, 8, 3)
    homo_coord = jnp.transpose(homo_o[:, :, :N], (2, 1, 0))   # (N, 8, 3)
    return abs_corners, homo_coord, thetas


def _reference(bbox_3d, P2):
    """Pure-JAX port of the PyTorch forward for validation."""
    cm = jnp.array(CORNER_MATRIX, jnp.float32)
    rel = 0.5 * cm[None, :, :] * bbox_3d[:, 3:6][:, None, :]
    offset = P2[0, 3] / P2[0, 0]
    thetas = bbox_3d[:, 6] + jnp.arctan2(bbox_3d[:, 0] + offset, bbox_3d[:, 2])
    c = jnp.cos(thetas)[:, None]
    s = jnp.sin(thetas)[:, None]
    rx = rel[:, :, 2] * c + rel[:, :, 0] * s
    rz = -rel[:, :, 2] * s + rel[:, :, 0] * c
    rot = jnp.stack([rx, rel[:, :, 1], rz], axis=-1)
    abs_c = rot + bbox_3d[:, 0:3][:, None, :]
    ones = jnp.ones((abs_c.shape[0], 8, 1), jnp.float32)
    cam = jnp.concatenate([abs_c, ones], axis=-1)
    camera_coord = jnp.einsum("ij,nkj->nki", P2, cam)
    homo = camera_coord / (camera_coord[:, :, 2:] + 1e-6)
    return abs_c, homo, thetas


def _make_boxes(key, n):
    k1, k2, k3, k4 = jax.random.split(key, 4)
    xy = jax.random.uniform(k1, (n, 2), jnp.float32, minval=-10.0, maxval=10.0)
    z = jax.random.uniform(k2, (n, 1), jnp.float32, minval=5.0, maxval=40.0)
    whl = jax.random.uniform(k3, (n, 3), jnp.float32, minval=1.0, maxval=4.0)
    alpha = jax.random.uniform(k4, (n, 1), jnp.float32, minval=-3.14, maxval=3.14)
    return jnp.concatenate([xy[:, 0:1], xy[:, 1:2], z, whl, alpha], axis=-1)


if __name__ == "__main__":
    key = jax.random.PRNGKey(0)

    # Deterministic KITTI-style projection matrix.
    tensor_p2 = jnp.array(
        [[721.54, 0.0, 609.56, 44.857],
         [0.0, 721.54, 172.85, 0.2163],
         [0.0, 0.0, 1.0, 0.002745]], dtype=jnp.float32)

    # Small case: single grid step.
    N = 8
    bbox_3d = _make_boxes(key, N)
    abs_corners, homo_coord, thetas = bbox3d_projector(bbox_3d, tensor_p2)
    jax.block_until_ready((abs_corners, homo_coord, thetas))

    abs_gt, homo_gt, theta_gt = _reference(bbox_3d, tensor_p2)
    assert abs_corners.shape == (N, 8, 3)
    assert homo_coord.shape == (N, 8, 3)
    assert thetas.shape == (N,)
    assert jnp.allclose(abs_corners, abs_gt, atol=1e-3, rtol=1e-3)
    assert jnp.allclose(homo_coord, homo_gt, atol=1e-2, rtol=1e-3)
    assert jnp.allclose(thetas, theta_gt, atol=1e-4, rtol=1e-4)

    # Multi-tile case: exercises the lane-axis grid (3 steps at tile=128).
    N2 = 300
    bbox_3d2 = _make_boxes(jax.random.PRNGKey(1), N2)
    abs2, homo2, theta2 = bbox3d_projector(bbox_3d2, tensor_p2, max_tile=128)
    jax.block_until_ready((abs2, homo2, theta2))
    abs_gt2, homo_gt2, theta_gt2 = _reference(bbox_3d2, tensor_p2)
    assert abs2.shape == (N2, 8, 3) and homo2.shape == (N2, 8, 3) and theta2.shape == (N2,)
    assert jnp.allclose(abs2, abs_gt2, atol=1e-3, rtol=1e-3)
    assert jnp.allclose(homo2, homo_gt2, atol=1e-2, rtol=1e-3)
    assert jnp.allclose(theta2, theta_gt2, atol=1e-4, rtol=1e-4)

    # Split-grid case: default max_tile, n_p >= 256 -> 2 "parallel" steps
    # (both TensorCores on v7x), and lane-dense (no-transpose) output path.
    N3 = 1000
    bbox_3d3 = _make_boxes(jax.random.PRNGKey(2), N3)
    abs3, homo3, theta3 = bbox3d_projector(bbox_3d3, tensor_p2,
                                           transpose_outputs=False)
    jax.block_until_ready((abs3, homo3, theta3))
    abs_gt3, homo_gt3, theta_gt3 = _reference(bbox_3d3, tensor_p2)
    assert abs3.shape == (3, 8, N3) and homo3.shape == (3, 8, N3)
    assert jnp.allclose(jnp.transpose(abs3, (2, 1, 0)), abs_gt3, atol=1e-3, rtol=1e-3)
    assert jnp.allclose(jnp.transpose(homo3, (2, 1, 0)), homo_gt3, atol=1e-2, rtol=1e-3)
    assert jnp.allclose(theta3, theta_gt3, atol=1e-4, rtol=1e-4)

    print("KERNEL_OK")
</pallas_src>

<mosaic_0001>
module attributes {stable_mosaic.version = 11 : i64} {
  func.func @_bbox3d_projector_kernel(%arg0: i32, %arg1: memref<8x128xf32, #tpu.memory_space<vmem>>, %arg2: memref<3x4xf32, #tpu.memory_space<smem>>, %arg3: memref<3x8x128xf32, #tpu.memory_space<vmem>>, %arg4: memref<3x8x128xf32, #tpu.memory_space<vmem>>, %arg5: memref<1x128xf32, #tpu.memory_space<vmem>>) attributes {dimension_semantics = [#tpu.dimension_semantics<parallel>], iteration_bounds = array<i64: 1>, scalar_prefetch = 0 : i64, scratch_operands = 0 : i64, tpu.core_type = #tpu.core_type<tc>, window_params = [{transform_indices = @transform_0, window_bounds = array<i64: 8, 128>}, {transform_indices = @transform_1, window_bounds = array<i64: 3, 4>}, {transform_indices = @transform_2, window_bounds = array<i64: 3, 8, 128>}, {transform_indices = @transform_3, window_bounds = array<i64: 3, 8, 128>}, {transform_indices = @transform_4, window_bounds = array<i64: 1, 128>}]} {
    %c0 = arith.constant 0 : index
    %c0_0 = arith.constant 0 : index
    %0 = vector.load %arg1[%c0, %c0_0] : memref<8x128xf32, #tpu.memory_space<vmem>>, vector<1x128xf32>
    %c1 = arith.constant 1 : index
    %c0_1 = arith.constant 0 : index
    %1 = vector.load %arg1[%c1, %c0_1] : memref<8x128xf32, #tpu.memory_space<vmem>>, vector<1x128xf32>
    %c2 = arith.constant 2 : index
    %c0_2 = arith.constant 0 : index
    %2 = vector.load %arg1[%c2, %c0_2] : memref<8x128xf32, #tpu.memory_space<vmem>>, vector<1x128xf32>
    %c3 = arith.constant 3 : index
    %c0_3 = arith.constant 0 : index
    %3 = vector.load %arg1[%c3, %c0_3] : memref<8x128xf32, #tpu.memory_space<vmem>>, vector<1x128xf32>
    %cst = arith.constant 5.000000e-01 : f32
    %4 = vector.broadcast %cst : f32 to vector<1x128xf32>
    %5 = arith.mulf %4, %3 : vector<1x128xf32>
    %c4 = arith.constant 4 : index
    %c0_4 = arith.constant 0 : index
    %6 = vector.load %arg1[%c4, %c0_4] : memref<8x128xf32, #tpu.memory_space<vmem>>, vector<1x128xf32>
    %cst_5 = arith.constant 5.000000e-01 : f32
    %7 = vector.broadcast %cst_5 : f32 to vector<1x128xf32>
    %8 = arith.mulf %7, %6 : vector<1x128xf32>
    %c5 = arith.constant 5 : index
    %c0_6 = arith.constant 0 : index
    %9 = vector.load %arg1[%c5, %c0_6] : memref<8x128xf32, #tpu.memory_space<vmem>>, vector<1x128xf32>
    %cst_7 = arith.constant 5.000000e-01 : f32
    %10 = vector.broadcast %cst_7 : f32 to vector<1x128xf32>
    %11 = arith.mulf %10, %9 : vector<1x128xf32>
    %c6 = arith.constant 6 : index
    %c0_8 = arith.constant 0 : index
    %12 = vector.load %arg1[%c6, %c0_8] : memref<8x128xf32, #tpu.memory_space<vmem>>, vector<1x128xf32>
    %c0_9 = arith.constant 0 : index
    %c0_10 = arith.constant 0 : index
    %13 = memref.load %arg2[%c0_9, %c0_10] : memref<3x4xf32, #tpu.memory_space<smem>>
    %c0_11 = arith.constant 0 : index
    %c1_12 = arith.constant 1 : index
    %14 = memref.load %arg2[%c0_11, %c1_12] : memref<3x4xf32, #tpu.memory_space<smem>>
    %c0_13 = arith.constant 0 : index
    %c2_14 = arith.constant 2 : index
    %15 = memref.load %arg2[%c0_13, %c2_14] : memref<3x4xf32, #tpu.memory_space<smem>>
    %c0_15 = arith.constant 0 : index
    %c3_16 = arith.constant 3 : index
    %16 = memref.load %arg2[%c0_15, %c3_16] : memref<3x4xf32, #tpu.memory_space<smem>>
    %c1_17 = arith.constant 1 : index
    %c0_18 = arith.constant 0 : index
    %17 = memref.load %arg2[%c1_17, %c0_18] : memref<3x4xf32, #tpu.memory_space<smem>>
    %c1_19 = arith.constant 1 : index
    %c1_20 = arith.constant 1 : index
    %18 = memref.load %arg2[%c1_19, %c1_20] : memref<3x4xf32, #tpu.memory_space<smem>>
    %c1_21 = arith.constant 1 : index
    %c2_22 = arith.constant 2 : index
    %19 = memref.load %arg2[%c1_21, %c2_22] : memref<3x4xf32, #tpu.memory_space<smem>>
    %c1_23 = arith.constant 1 : index
    %c3_24 = arith.constant 3 : index
    %20 = memref.load %arg2[%c1_23, %c3_24] : memref<3x4xf32, #tpu.memory_space<smem>>
    %c2_25 = arith.constant 2 : index
    %c0_26 = arith.constant 0 : index
    %21 = memref.load %arg2[%c2_25, %c0_26] : memref<3x4xf32, #tpu.memory_space<smem>>
    %c2_27 = arith.constant 2 : index
    %c1_28 = arith.constant 1 : index
    %22 = memref.load %arg2[%c2_27, %c1_28] : memref<3x4xf32, #tpu.memory_space<smem>>
    %c2_29 = arith.constant 2 : index
    %c2_30 = arith.constant 2 : index
    %23 = memref.load %arg2[%c2_29, %c2_30] : memref<3x4xf32, #tpu.memory_space<smem>>
    %c2_31 = arith.constant 2 : index
    %c3_32 = arith.constant 3 : index
    %24 = memref.load %arg2[%c2_31, %c3_32] : memref<3x4xf32, #tpu.memory_space<smem>>
    %25 = arith.divf %16, %13 : f32
    %26 = vector.broadcast %25 : f32 to vector<1x128xf32>
    %27 = arith.addf %0, %26 : vector<1x128xf32>
    %28 = math.atan2 %27, %2 : vector<1x128xf32>
    %29 = arith.addf %12, %28 : vector<1x128xf32>
    %30 = math.cos %29 : vector<1x128xf32>
    %31 = math.sin %29 : vector<1x128xf32>
    %32 = vector.shape_cast %0 : vector<1x128xf32> to vector<1x128xf32>
    %33 = vector.broadcast %32 : vector<1x128xf32> to vector<8x128xf32>
    %34 = vector.shape_cast %1 : vector<1x128xf32> to vector<1x128xf32>
    %35 = vector.broadcast %34 : vector<1x128xf32> to vector<8x128xf32>
    %36 = vector.shape_cast %2 : vector<1x128xf32> to vector<1x128xf32>
    %37 = vector.broadcast %36 : vector<1x128xf32> to vector<8x128xf32>
    %38 = vector.shape_cast %8 : vector<1x128xf32> to vector<1x128xf32>
    %39 = vector.broadcast %38 : vector<1x128xf32> to vector<8x128xf32>
    %40 = arith.mulf %11, %30 : vector<1x128xf32>
    %41 = vector.shape_cast %40 : vector<1x128xf32> to vector<1x128xf32>
    %42 = vector.broadcast %41 : vector<1x128xf32> to vector<8x128xf32>
    %43 = arith.mulf %11, %31 : vector<1x128xf32>
    %44 = vector.shape_cast %43 : vector<1x128xf32> to vector<1x128xf32>
    %45 = vector.broadcast %44 : vector<1x128xf32> to vector<8x128xf32>
    %46 = arith.mulf %5, %30 : vector<1x128xf32>
    %47 = vector.shape_cast %46 : vector<1x128xf32> to vector<1x128xf32>
    %48 = vector.broadcast %47 : vector<1x128xf32> to vector<8x128xf32>
    %49 = arith.mulf %5, %31 : vector<1x128xf32>
    %50 = vector.shape_cast %49 : vector<1x128xf32> to vector<1x128xf32>
    %51 = vector.broadcast %50 : vector<1x128xf32> to vector<8x128xf32>
    %52 = tpu.iota {dimensions = array<i32: 0>} : vector<8x128xi32>
    %c1_i32 = arith.constant 1 : i32
    %53 = vector.broadcast %c1_i32 : i32 to vector<8x128xi32>
    %54 = arith.cmpi sge, %52, %53 : vector<8x128xi32>
    %c4_i32 = arith.constant 4 : i32
    %55 = vector.broadcast %c4_i32 : i32 to vector<8x128xi32>
    %56 = arith.cmpi sle, %52, %55 : vector<8x128xi32>
    %57 = arith.andi %54, %56 : vector<8x128xi1>
    %cst_33 = arith.constant 1.000000e+00 : f32
    %cst_34 = arith.constant -1.000000e+00 : f32
    %58 = vector.broadcast %cst_33 : f32 to vector<8x128xf32>
    %59 = vector.broadcast %cst_34 : f32 to vector<8x128xf32>
    %60 = arith.select %57, %58, %59 : vector<8x128xi1>, vector<8x128xf32>
    %c2_i32 = arith.constant 2 : i32
    %61 = vector.broadcast %c2_i32 : i32 to vector<8x128xi32>
    %62 = arith.andi %52, %61 : vector<8x128xi32>
    %c0_i32 = arith.constant 0 : i32
    %63 = vector.broadcast %c0_i32 : i32 to vector<8x128xi32>
    %64 = arith.cmpi ne, %62, %63 : vector<8x128xi32>
    %cst_35 = arith.constant 1.000000e+00 : f32
    %cst_36 = arith.constant -1.000000e+00 : f32
    %65 = vector.broadcast %cst_35 : f32 to vector<8x128xf32>
    %66 = vector.broadcast %cst_36 : f32 to vector<8x128xf32>
    %67 = arith.select %64, %65, %66 : vector<8x128xi1>, vector<8x128xf32>
    %c3_i32 = arith.constant 3 : i32
    %68 = vector.broadcast %c3_i32 : i32 to vector<8x128xi32>
    %69 = arith.cmpi sge, %52, %68 : vector<8x128xi32>
    %c6_i32 = arith.constant 6 : i32
    %70 = vector.broadcast %c6_i32 : i32 to vector<8x128xi32>
    %71 = arith.cmpi sle, %52, %70 : vector<8x128xi32>
    %72 = arith.andi %69, %71 : vector<8x128xi1>
    %cst_37 = arith.constant 1.000000e+00 : f32
    %cst_38 = arith.constant -1.000000e+00 : f32
    %73 = vector.broadcast %cst_37 : f32 to vector<8x128xf32>
    %74 = vector.broadcast %cst_38 : f32 to vector<8x128xf32>
    %75 = arith.select %72, %73, %74 : vector<8x128xi1>, vector<8x128xf32>
    %76 = arith.mulf %75, %42 : vector<8x128xf32>
    %77 = arith.addf %33, %76 : vector<8x128xf32>
    %78 = arith.mulf %60, %51 : vector<8x128xf32>
    %79 = arith.addf %77, %78 : vector<8x128xf32>
    %80 = arith.mulf %67, %39 : vector<8x128xf32>
    %81 = arith.addf %35, %80 : vector<8x128xf32>
    %82 = arith.mulf %75, %45 : vector<8x128xf32>
    %83 = arith.subf %37, %82 : vector<8x128xf32>
    %84 = arith.mulf %60, %48 : vector<8x128xf32>
    %85 = arith.addf %83, %84 : vector<8x128xf32>
    %c0_39 = arith.constant 0 : index
    %c0_40 = arith.constant 0 : index
    %c0_41 = arith.constant 0 : index
    %86 = vector.load %arg3[%c0_39, %c0_40, %c0_41] : memref<3x8x128xf32, #tpu.memory_space<vmem>>, vector<1x8x128xf32>
    %87 = vector.shape_cast %86 : vector<1x8x128xf32> to vector<8x128xf32>
    %88 = vector.shape_cast %79 : vector<8x128xf32> to vector<1x8x128xf32>
    tpu.vector_store %arg3[%c0_39, %c0_40, %c0_41], %88 {strides = array<i32>} : memref<3x8x128xf32, #tpu.memory_space<vmem>>, vector<1x8x128xf32>,
    %c1_42 = arith.constant 1 : index
    %c0_43 = arith.constant 0 : index
    %c0_44 = arith.constant 0 : index
    %89 = vector.load %arg3[%c1_42, %c0_43, %c0_44] : memref<3x8x128xf32, #tpu.memory_space<vmem>>, vector<1x8x128xf32>
    %90 = vector.shape_cast %89 : vector<1x8x128xf32> to vector<8x128xf32>
    %91 = vector.shape_cast %81 : vector<8x128xf32> to vector<1x8x128xf32>
    tpu.vector_store %arg3[%c1_42, %c0_43, %c0_44], %91 {strides = array<i32>} : memref<3x8x128xf32, #tpu.memory_space<vmem>>, vector<1x8x128xf32>,
    %c2_45 = arith.constant 2 : index
    %c0_46 = arith.constant 0 : index
    %c0_47 = arith.constant 0 : index
    %92 = vector.load %arg3[%c2_45, %c0_46, %c0_47] : memref<3x8x128xf32, #tpu.memory_space<vmem>>, vector<1x8x128xf32>
    %93 = vector.shape_cast %92 : vector<1x8x128xf32> to vector<8x128xf32>
    %94 = vector.shape_cast %85 : vector<8x128xf32> to vector<1x8x128xf32>
    tpu.vector_store %arg3[%c2_45, %c0_46, %c0_47], %94 {strides = array<i32>} : memref<3x8x128xf32, #tpu.memory_space<vmem>>, vector<1x8x128xf32>,
    %95 = vector.broadcast %13 : f32 to vector<8x128xf32>
    %96 = arith.mulf %95, %79 : vector<8x128xf32>
    %97 = vector.broadcast %14 : f32 to vector<8x128xf32>
    %98 = arith.mulf %97, %81 : vector<8x128xf32>
    %99 = arith.addf %96, %98 : vector<8x128xf32>
    %100 = vector.broadcast %15 : f32 to vector<8x128xf32>
    %101 = arith.mulf %100, %85 : vector<8x128xf32>
    %102 = arith.addf %99, %101 : vector<8x128xf32>
    %103 = vector.broadcast %16 : f32 to vector<8x128xf32>
    %104 = arith.addf %102, %103 : vector<8x128xf32>
    %105 = vector.broadcast %17 : f32 to vector<8x128xf32>
    %106 = arith.mulf %105, %79 : vector<8x128xf32>
    %107 = vector.broadcast %18 : f32 to vector<8x128xf32>
    %108 = arith.mulf %107, %81 : vector<8x128xf32>
    %109 = arith.addf %106, %108 : vector<8x128xf32>
    %110 = vector.broadcast %19 : f32 to vector<8x128xf32>
    %111 = arith.mulf %110, %85 : vector<8x128xf32>
    %112 = arith.addf %109, %111 : vector<8x128xf32>
    %113 = vector.broadcast %20 : f32 to vector<8x128xf32>
    %114 = arith.addf %112, %113 : vector<8x128xf32>
    %115 = vector.broadcast %21 : f32 to vector<8x128xf32>
    %116 = arith.mulf %115, %79 : vector<8x128xf32>
    %117 = vector.broadcast %22 : f32 to vector<8x128xf32>
    %118 = arith.mulf %117, %81 : vector<8x128xf32>
    %119 = arith.addf %116, %118 : vector<8x128xf32>
    %120 = vector.broadcast %23 : f32 to vector<8x128xf32>
    %121 = arith.mulf %120, %85 : vector<8x128xf32>
    %122 = arith.addf %119, %121 : vector<8x128xf32>
    %123 = vector.broadcast %24 : f32 to vector<8x128xf32>
    %124 = arith.addf %122, %123 : vector<8x128xf32>
    %cst_48 = arith.constant 9.99999997E-7 : f32
    %125 = vector.broadcast %cst_48 : f32 to vector<8x128xf32>
    %126 = arith.addf %124, %125 : vector<8x128xf32>
    %127 = tpu.reciprocal %126 {approx = true} : vector<8x128xf32> -> vector<8x128xf32>
    %128 = arith.mulf %126, %127 : vector<8x128xf32>
    %cst_49 = arith.constant 2.000000e+00 : f32
    %129 = vector.broadcast %cst_49 : f32 to vector<8x128xf32>
    %130 = arith.subf %129, %128 : vector<8x128xf32>
    %131 = arith.mulf %127, %130 : vector<8x128xf32>
    %132 = arith.mulf %104, %131 : vector<8x128xf32>
    %c0_50 = arith.constant 0 : index
    %c0_51 = arith.constant 0 : index
    %c0_52 = arith.constant 0 : index
    %133 = vector.load %arg4[%c0_50, %c0_51, %c0_52] : memref<3x8x128xf32, #tpu.memory_space<vmem>>, vector<1x8x128xf32>
    %134 = vector.shape_cast %133 : vector<1x8x128xf32> to vector<8x128xf32>
    %135 = vector.shape_cast %132 : vector<8x128xf32> to vector<1x8x128xf32>
    tpu.vector_store %arg4[%c0_50, %c0_51, %c0_52], %135 {strides = array<i32>} : memref<3x8x128xf32, #tpu.memory_space<vmem>>, vector<1x8x128xf32>,
    %136 = arith.mulf %114, %131 : vector<8x128xf32>
    %c1_53 = arith.constant 1 : index
    %c0_54 = arith.constant 0 : index
    %c0_55 = arith.constant 0 : index
    %137 = vector.load %arg4[%c1_53, %c0_54, %c0_55] : memref<3x8x128xf32, #tpu.memory_space<vmem>>, vector<1x8x128xf32>
    %138 = vector.shape_cast %137 : vector<1x8x128xf32> to vector<8x128xf32>
    %139 = vector.shape_cast %136 : vector<8x128xf32> to vector<1x8x128xf32>
    tpu.vector_store %arg4[%c1_53, %c0_54, %c0_55], %139 {strides = array<i32>} : memref<3x8x128xf32, #tpu.memory_space<vmem>>, vector<1x8x128xf32>,
    %140 = arith.mulf %124, %131 : vector<8x128xf32>
    %c2_56 = arith.constant 2 : index
    %c0_57 = arith.constant 0 : index
    %c0_58 = arith.constant 0 : index
    %141 = vector.load %arg4[%c2_56, %c0_57, %c0_58] : memref<3x8x128xf32, #tpu.memory_space<vmem>>, vector<1x8x128xf32>
    %142 = vector.shape_cast %141 : vector<1x8x128xf32> to vector<8x128xf32>
    %143 = vector.shape_cast %140 : vector<8x128xf32> to vector<1x8x128xf32>
    tpu.vector_store %arg4[%c2_56, %c0_57, %c0_58], %143 {strides = array<i32>} : memref<3x8x128xf32, #tpu.memory_space<vmem>>, vector<1x8x128xf32>,
    %c0_59 = arith.constant 0 : index
    %c0_60 = arith.constant 0 : index
    %144 = vector.load %arg5[%c0_59, %c0_60] : memref<1x128xf32, #tpu.memory_space<vmem>>, vector<1x128xf32>
    tpu.vector_store %arg5[%c0_59, %c0_60], %29 {strides = array<i32>} : memref<1x128xf32, #tpu.memory_space<vmem>>, vector<1x128xf32>,
    return
  }
  func.func @transform_0(%arg0: i32) -> (i32, i32) {
    %c0_i32 = arith.constant 0 : i32
    %c0_i32_0 = arith.constant 0 : i32
    return %c0_i32, %arg0 : i32, i32
  }
  func.func @transform_1(%arg0: i32) -> (i32, i32) {
    %c0_i32 = arith.constant 0 : i32
    %c0_i32_0 = arith.constant 0 : i32
    %c0_i32_1 = arith.constant 0 : i32
    return %c0_i32, %c0_i32_0 : i32, i32
  }
  func.func @transform_2(%arg0: i32) -> (i32, i32, i32) {
    %c0_i32 = arith.constant 0 : i32
    %c0_i32_0 = arith.constant 0 : i32
    %c0_i32_1 = arith.constant 0 : i32
    return %c0_i32, %c0_i32_0, %arg0 : i32, i32, i32
  }
  func.func @transform_3(%arg0: i32) -> (i32, i32, i32) {
    %c0_i32 = arith.constant 0 : i32
    %c0_i32_0 = arith.constant 0 : i32
    %c0_i32_1 = arith.constant 0 : i32
    return %c0_i32, %c0_i32_0, %arg0 : i32, i32, i32
  }
  func.func @transform_4(%arg0: i32) -> (i32, i32) {
    %c0_i32 = arith.constant 0 : i32
    %c0_i32_0 = arith.constant 0 : i32
    return %c0_i32, %arg0 : i32, i32
  }
}

</mosaic_0001>

<llo_original>
// kernel: tpu_custom_call.1
$region0: #{tpu_custom_call.1}
  #allocation0 [shape = 'u32[]', space=smem, size = 0x4, offset = 0x4, fixed_abs, tag = 'smem constant byte address 0x4 - core index']
  #allocation1 [shape = 'u32[144,128]{1,0:T(1,128)}', space=vmem, size = 0x12000, scoped, tag = 'internal scratch']
  %s0 = inlined_call_operand.hbm [shape: f32[8,128], index: 0, kind: input, shape index: {}]
  %s1 = inlined_call_operand.hbm [shape: f32[3,4], index: 1, kind: input, shape index: {}]
  %s2 = inlined_call_operand.hbm [shape: f32[3,8,128], index: 2, kind: output, shape index: {0}]
  %s3 = inlined_call_operand.hbm [shape: f32[3,8,128], index: 3, kind: output, shape index: {1}]
  %s4 = inlined_call_operand.hbm [shape: f32[1,128], index: 4, kind: output, shape index: {2}]
  %5 = xla_tuple %s2, %s3, %s4
  %s6 = sld [smem:[#allocation0]]
  $region42: #{tpu_custom_call.1} parent=0
    _
  %s8 = ssub.s32 1, %s6
  %s9 = scalar_select 0, %s8, %s6
  $region1: #{tpu_custom_call.1} parent=0
    #allocation2 [shape = 'u8[4096]{0}', space=vmem, size = 0x1000, scoped, tag = 'input window, operand 0, single buffered']
    #allocation3 [shape = 's32[1]{0}', space=sflag, size = 0x4, scoped, tag = 'scoped memory for tpu_custom_call.1']
    #allocation4 [shape = 's32[1]{0}', space=sflag, size = 0x4, scoped, tag = 'scoped memory for tpu_custom_call.1']
    #allocation5 [shape = 's32[1]{0}', space=sflag, size = 0x4, scoped, tag = 'scoped memory for tpu_custom_call.1']
    #allocation6 [shape = 'u8[2048]{0}', space=smem, size = 0x800, scoped, tag = 'input window, operand 1, single buffered']
    #allocation7 [shape = 'u8[12288]{0}', space=vmem, size = 0x3000, scoped, tag = 'output window, operand 0, single buffered']
    #allocation8 [shape = 'u8[12288]{0}', space=vmem, size = 0x3000, scoped, tag = 'output window, operand 1, single buffered']
    #allocation9 [shape = 's32[1]{0}', space=sflag, size = 0x4, scoped, tag = 'scoped memory for tpu_custom_call.1']
    #allocation10 [shape = 'u8[512]{0}', space=vmem, size = 0x400, scoped, tag = 'output window, operand 2, single buffered']
    %10 = vsyncpa [#allocation3], 0
    %11 = vsyncpa [#allocation5], 0
    %12 = vsyncpa [#allocation4], 0
    %13 = vsyncpa [#allocation9], 0
    // Predicated region
    $region2: #{tpu_custom_call.1} parent=1 // pred_check
      _
    $region3: #{tpu_custom_call.1} parent=1 // pred_check_branch
      %15 = sbr.rel (0) target = $region5
    $region4: #{tpu_custom_call.1} parent=1 // pred_region
      %s17 = ssub.s32 128, 128
      %18 = vsyncadd [#allocation3], %s17
      %s20 = sshll.u32 [#allocation2], 4
      %s21 = int_to_ptr.vmem [resolvable:$true] %s20
      %23 = dma.hbm_to_vmem [thread:$0]  %s0, 128, %s21, [#allocation3]
    $region5: #{tpu_custom_call.1} parent=1 // pred_fallthru
      _
    // Predicated region
    $region6: #{tpu_custom_call.1} parent=1 // pred_check
      _
    $region7: #{tpu_custom_call.1} parent=1 // pred_check_branch
      %25 = sbr.rel (0) target = $region9
    $region8: #{tpu_custom_call.1} parent=1 // pred_region
      %s27 = ssub.s32 64, 64
      %28 = vsyncadd [#allocation5], %s27
      %31 = dma.hbm_to_smem %s1, 64, [#allocation6], [#allocation5]
    $region9: #{tpu_custom_call.1} parent=1 // pred_fallthru
      _
    // Predicated region
    $region10: #{tpu_custom_call.1} parent=1 // pred_check
      _
    $region11: #{tpu_custom_call.1} parent=1 // pred_check_branch
      %33 = sbr.rel (0) target = $region13
    $region12: #{tpu_custom_call.1} parent=1 // pred_region
      %34 = dma.done [#allocation3], 128
    $region13: #{tpu_custom_call.1} parent=1 // pred_fallthru
      _
    // Predicated region
    $region14: #{tpu_custom_call.1} parent=1 // pred_check
      _
    $region15: #{tpu_custom_call.1} parent=1 // pred_check_branch
      %36 = sbr.rel (0) target = $region17
    $region16: #{tpu_custom_call.1} parent=1 // pred_region
      %37 = dma.done [#allocation5], 64
    $region17: #{tpu_custom_call.1} parent=1 // pred_fallthru
      _
    %38 = sfence
    %v39 = vld [vmem:[#allocation2] sm:$0x1]
    %v40 = vld [vmem:[#allocation2 + $0x1] sm:$0x1]
    %v41 = vld [vmem:[#allocation2 + $0x2] sm:$0x1]
    %v42 = vld [vmem:[#allocation2 + $0x3] sm:$0x1]
    %v43 = vmul.f32 %v42, 0.5
    %v44 = vld [vmem:[#allocation2 + $0x4] sm:$0x1]
    %v45 = vmul.f32 %v44, 0.5
    %v46 = vld [vmem:[#allocation2 + $0x5] sm:$0x1]
    %v47 = vmul.f32 %v46, 0.5
    %v48 = vld [vmem:[#allocation2 + $0x6] sm:$0x1]
    %s49 = sld [smem:[#allocation6]]
    %s50 = sld [smem:[#allocation6 + $0x1]]
    %s51 = sld [smem:[#allocation6 + $0x2]]
    %s52 = sld [smem:[#allocation6 + $0x3]]
    %s53 = sld [smem:[#allocation6 + $0x80]]
    %s54 = sld [smem:[#allocation6 + $0x81]]
    %s55 = sld [smem:[#allocation6 + $0x82]]
    %s56 = sld [smem:[#allocation6 + $0x83]]
    %s57 = sld [smem:[#allocation6 + $0x100]]
    %s58 = sld [smem:[#allocation6 + $0x101]]
    %s59 = sld [smem:[#allocation6 + $0x102]]
    %s60 = sld [smem:[#allocation6 + $0x103]]
    %v61 = vstv %s49
    %v62 = vrcp.pop %v61
    %s63 = vtos %v62
    %s64 = smul.f32 %s52, %s63
    %v65 = vstv %s64
    %v66 = vadd.f32 %v39, %v65
    %v67 = vand.u32 2147483647, %v41
    %v68 = vand.u32 2147483647, %v66
    %v69 = vmin.f32 %v67, %v68
    %v70 = vmax.f32 %v67, %v68
    %v71 = vrcp.pop %v70
    %v72 = vmul.f32 %v69, %v71
    %v73 = vmul.f32 %v72, %v72
    %v74 = vmul.f32 0.002785687, %v73
    %v75 = vadd.f32 %v74, -0.015866
    %v76 = vmul.f32 %v75, %v73
    %v77 = vadd.f32 %v76, 0.04247222
    %v78 = vmul.f32 %v77, %v73
    %v79 = vadd.f32 %v78, -0.074975304
    %v80 = vmul.f32 %v79, %v73
    %v81 = vadd.f32 %v80, 0.1064488
    %v82 = vmul.f32 %v81, %v73
    %v83 = vadd.f32 %v82, -0.14207031
    %v84 = vmul.f32 %v83, %v73
    %v85 = vadd.f32 %v84, 0.19993454
    %v86 = vmul.f32 %v85, %v73
    %v87 = vadd.f32 %v86, -0.33333147
    %v88 = vmul.f32 %v87, %v73
    %v89 = vmul.f32 %v88, %v72
    %v90 = vadd.f32 %v89, %v72
    %vm91 = vcmp.gt.f32.partialorder %v68, %v67
    %v92 = vsub.f32 1.5707964, %v90
    %v93 = vsel %vm91, %v92, %v90
    %vm94 = vcmp.lt.f32.partialorder %v41, 0.0
    %v95 = vsub.f32 3.1415927, %v93
    %v96 = vsel %vm94, %v95, %v93
    %vm97 = vcmp.lt.s32.totalorder %v41, 0
    %v98 = vsel %vm97, 3.1415927, 0.0
    %vm99 = vcmp.eq.f32.partialorder %v66, 0.0
    %v100 = vsel %vm99, %v98, %v96
    %vm101 = vcmp.ne.f32.partialorder %v41, %v41
    %vm102 = vcmp.ne.f32.partialorder %v66, %v66
    %vm103 = vmor %vm101, %vm102
    %v104 = vsel %vm103, nan, %v100
    %vm105 = vcmp.lt.f32.partialorder %v41, 0.0
    %v106 = vsel %vm105, 2.3561945, 0.7853982
    %vm107 = vcmp.eq.s32.totalorder %v67, inf
    %vm108 = vcmp.eq.s32.totalorder %v68, inf
    %vm109 = vmand %vm107, %vm108
    %v110 = vsel %vm109, %v106, %v104
    %v111 = vand.u32 2147483647, %v110
    %v112 = vand.u32 %v66, 2147483648
    %v113 = vor.u32 %v111, %v112
    %v114 = vadd.f32 %v48, %v113
    %v115 = vand.u32 2147483647, %v114
    %vm116 = vcmp.le.f32.partialorder %v115, 0.7853982
    %vm117 = vcmp.lt.s32.totalorder %v114, 0
    %v118 = vand.u32 %v114, 2139095040
    %v119 = vshrl.u32 %v118, 23
    %v120 = vsub.s32 %v119, 127
    %v121 = vand.u32 2147483647, %v114
    %v122 = vand.u32 %v121, 8388607
    %v123 = vor.u32 %v122, 8388608
    %v124 = vsub.s32 0, %v123
    %v125 = vadd.s32 %v120, 1
    %vm126 = vcmp.gt.s32.totalorder %v125, 0
    %v127 = vsel %vm126, %v125, 0
    %v128 = vshrl.u32 %v127, 5
    %v129 = vand.u32 %v127, 31
    %v130 = vsub.s32 32, %v129
    %v131 = vshrl.u32 683565275, %v130
    %v132 = vshll.u32 683565275, %v129
    %v133 = vshrl.u32 2475754826, %v130
    %v134 = vor.u32 %v132, %v133
    %v135 = vshll.u32 2475754826, %v129
    %v136 = vshrl.u32 2131351028, %v130
    %v137 = vor.u32 %v135, %v136
    %v138 = vshll.u32 2131351028, %v129
    %v139 = vshrl.u32 2102212464, %v130
    %v140 = vor.u32 %v138, %v139
    %v141 = vshll.u32 2102212464, %v129
    %v142 = vshrl.u32 920167782, %v130
    %v143 = vor.u32 %v141, %v142
    %v144 = vshll.u32 920167782, %v129
    %v145 = vshrl.u32 1326507024, %v130
    %v146 = vor.u32 %v144, %v145
    %vm147 = vcmp.lt.s32.totalorder %v128, 1
    %vm148 = vcmp.lt.s32.totalorder %v128, 2
    %vm149 = vcmp.lt.s32.totalorder %v128, 3
    %vm150 = vcmp.lt.s32.totalorder %v128, 4
    %v151 = vsel %vm147, %v131, %v134
    %v152 = vsel %vm150, %v140, 2102212464
    %v153 = vsel %vm149, %v137, %v152
    %v154 = vsel %vm148, %v151, %v153
    %v155 = vsel %vm147, %v134, %v137
    %v156 = vsel %vm150, %v143, 920167782
    %v157 = vsel %vm149, %v140, %v156
    %v158 = vsel %vm148, %v155, %v157
    %v159 = vsel %vm147, %v137, %v140
    %v160 = vsel %vm150, %v146, 1326507024
    %v161 = vsel %vm149, %v143, %v160
    %v162 = vsel %vm148, %v159, %v161
    %v163 = vshll.u32 %v123, 8
    %v164 = vmul.u32.u64.compose %v163, %v162
    %v165 = vextract.low.u32 %v164
    %v166 = vextract.high.u32 %v164
    %v167 = vmul.u32.u64.compose %v163, %v158
    %v168 = vextract.low.u32 %v167
    %v169 = vextract.high.u32 %v167
    %v170 = vmul.u32 %v163, %v154
    %v171 = vadd.s32 %v166, %v168
    %vm172 = vc.u32 %v166, %v168
    %v173 = vadd.s32 %v169, 1
    %v174 = vsel %vm172, %v173, %v169
    %v175 = vadd.s32 %v170, %v174
    %v176 = vadd.s32 %v175, 536870912
    %v177 = vshrl.u32 %v176, 30
    %v178 = vshll.u32 %v177, 30
    %v179 = vsub.s32 %v175, %v178
    %vm180 = vcmp.lt.s32.totalorder %v179, 0
    %v181 = vsub.s32 0, %v179
    %v182 = vsel %vm180, %v181, %v179
    %v183 = vclz %v182
    %v184 = vsub.s32 %v183, 2
    %vm185 = vcmp.gt.s32.totalorder 0, %v184
    %v186 = vsel %vm185, 0, %v184
    %v187 = vsub.s32 32, %v186
    %v188 = vshll.u32 %v179, %v186
    %v189 = vshrl.u32 %v171, %v187
    %v190 = vor.u32 %v188, %v189
    %v191 = vsub.s32 4294967266, %v186
    %v192 = vadd.s32 %v191, 127
    %v193 = vshll.u32 %v192, 23
    %v194 = vor.u32 4788187, %v193
    %v195 = vand.u32 2147483647, %v194
    %v197 = vcvt.s32.f32 %v190
    %v198 = vmul.f32 %v197, %v195
    %v199 = vxor.u32 %v198, 2147483648
    %v200 = vsel %vm117, %v199, %v198
    %v201 = vsub.s32 4, %v177
    %v202 = vsel %vm117, %v201, %v177
    %v203 = vsel %vm116, %v114, %v200
    %v204 = vsel %vm116, 0, %v202
    %v205 = vcosq.f32.pop %v203
    %v206 = vsinq.f32.pop %v203
    %vm207 = vweird.f32 %v114
    %v208 = vand.u32 %v204, 3
    %vm209 = vcmp.lt.s32.totalorder %v208, 2
    %vm210 = vcmp.eq.s32.totalorder %v208, 0
    %v211 = vxor.u32 %v206, 2147483648
    %v212 = vsel %vm210, %v205, %v211
    %vm213 = vcmp.eq.s32.totalorder %v208, 2
    %v214 = vxor.u32 %v205, 2147483648
    %v215 = vsel %vm213, %v214, %v206
    %v216 = vsel %vm209, %v212, %v215
    %v217 = vsel %vm207, nan, %v216
    %v218 = vand.u32 2147483647, %v114
    %vm219 = vcmp.le.f32.partialorder %v218, 0.7853982
    %vm220 = vcmp.lt.s32.totalorder %v114, 0
    %v221 = vand.u32 %v114, 2139095040
    %v222 = vshrl.u32 %v221, 23
    %v223 = vsub.s32 %v222, 127
    %v224 = vand.u32 2147483647, %v114
    %v225 = vand.u32 %v224, 8388607
    %v226 = vor.u32 %v225, 8388608
    %v227 = vsub.s32 0, %v226
    %v228 = vadd.s32 %v223, 1
    %vm229 = vcmp.gt.s32.totalorder %v228, 0
    %v230 = vsel %vm229, %v228, 0
    %v231 = vshrl.u32 %v230, 5
    %v232 = vand.u32 %v230, 31
    %v233 = vsub.s32 32, %v232
    %v234 = vshrl.u32 683565275, %v233
    %v235 = vshll.u32 683565275, %v232
    %v236 = vshrl.u32 2475754826, %v233
    %v237 = vor.u32 %v235, %v236
    %v238 = vshll.u32 2475754826, %v232
    %v239 = vshrl.u32 2131351028, %v233
    %v240 = vor.u32 %v238, %v239
    %v241 = vshll.u32 2131351028, %v232
    %v242 = vshrl.u32 2102212464, %v233
    %v243 = vor.u32 %v241, %v242
    %v244 = vshll.u32 2102212464, %v232
    %v245 = vshrl.u32 920167782, %v233
    %v246 = vor.u32 %v244, %v245
    %v247 = vshll.u32 920167782, %v232
    %v248 = vshrl.u32 1326507024, %v233
    %v249 = vor.u32 %v247, %v248
    %vm250 = vcmp.lt.s32.totalorder %v231, 1
    %vm251 = vcmp.lt.s32.totalorder %v231, 2
    %vm252 = vcmp.lt.s32.totalorder %v231, 3
    %vm253 = vcmp.lt.s32.totalorder %v231, 4
    %v254 = vsel %vm250, %v234, %v237
    %v255 = vsel %vm253, %v243, 2102212464
    %v256 = vsel %vm252, %v240, %v255
    %v257 = vsel %vm251, %v254, %v256
    %v258 = vsel %vm250, %v237, %v240
    %v259 = vsel %vm253, %v246, 920167782
    %v260 = vsel %vm252, %v243, %v259
    %v261 = vsel %vm251, %v258, %v260
    %v262 = vsel %vm250, %v240, %v243
    %v263 = vsel %vm253, %v249, 1326507024
    %v264 = vsel %vm252, %v246, %v263
    %v265 = vsel %vm251, %v262, %v264
    %v266 = vshll.u32 %v226, 8
    %v267 = vmul.u32.u64.compose %v266, %v265
    %v268 = vextract.low.u32 %v267
    %v269 = vextract.high.u32 %v267
    %v270 = vmul.u32.u64.compose %v266, %v261
    %v271 = vextract.low.u32 %v270
    %v272 = vextract.high.u32 %v270
    %v273 = vmul.u32 %v266, %v257
    %v274 = vadd.s32 %v269, %v271
    %vm275 = vc.u32 %v269, %v271
    %v276 = vadd.s32 %v272, 1
    %v277 = vsel %vm275, %v276, %v272
    %v278 = vadd.s32 %v273, %v277
    %v279 = vadd.s32 %v278, 536870912
    %v280 = vshrl.u32 %v279, 30
    %v281 = vshll.u32 %v280, 30
    %v282 = vsub.s32 %v278, %v281
    %vm283 = vcmp.lt.s32.totalorder %v282, 0
    %v284 = vsub.s32 0, %v282
    %v285 = vsel %vm283, %v284, %v282
    %v286 = vclz %v285
    %v287 = vsub.s32 %v286, 2
    %vm288 = vcmp.gt.s32.totalorder 0, %v287
    %v289 = vsel %vm288, 0, %v287
    %v290 = vsub.s32 32, %v289
    %v291 = vshll.u32 %v282, %v289
    %v292 = vshrl.u32 %v274, %v290
    %v293 = vor.u32 %v291, %v292
    %v294 = vsub.s32 4294967266, %v289
    %v295 = vadd.s32 %v294, 127
    %v296 = vshll.u32 %v295, 23
    %v297 = vor.u32 4788187, %v296
    %v298 = vand.u32 2147483647, %v297
    %v300 = vcvt.s32.f32 %v293
    %v301 = vmul.f32 %v300, %v298
    %v302 = vxor.u32 %v301, 2147483648
    %v303 = vsel %vm220, %v302, %v301
    %v304 = vsub.s32 4, %v280
    %v305 = vsel %vm220, %v304, %v280
    %v306 = vsel %vm219, %v114, %v303
    %v307 = vsel %vm219, 0, %v305
    %v308 = vcosq.f32.pop %v306
    %v309 = vsinq.f32.pop %v306
    %vm310 = vweird.f32 %v114
    %v311 = vadd.s32 %v307, 3
    %v312 = vand.u32 %v311, 3
    %vm313 = vcmp.lt.s32.totalorder %v312, 2
    %vm314 = vcmp.eq.s32.totalorder %v312, 0
    %v315 = vxor.u32 %v309, 2147483648
    %v316 = vsel %vm314, %v308, %v315
    %vm317 = vcmp.eq.s32.totalorder %v312, 2
    %v318 = vxor.u32 %v308, 2147483648
    %v319 = vsel %vm317, %v318, %v309
    %v320 = vsel %vm313, %v316, %v319
    %v321 = vsel %vm310, nan, %v320
    %v322 = vlaneseq
    %v323 = vshrl.u32 %v322, 7
    %v324 = vsub.s32 0, %v323
    %v325 = vrot.slane %v39, %v324
    %v326 = vlaneseq
    %v327 = vshrl.u32 %v326, 7
    %v328 = vsub.s32 0, %v327
    %v329 = vrot.slane %v40, %v328
    %v330 = vlaneseq
    %v331 = vshrl.u32 %v330, 7
    %v332 = vsub.s32 0, %v331
    %v333 = vrot.slane %v41, %v332
    %v334 = vlaneseq
    %v335 = vshrl.u32 %v334, 7
    %v336 = vsub.s32 0, %v335
    %v337 = vrot.slane %v45, %v336
    %v338 = vmul.f32 %v47, %v217
    %v339 = vlaneseq
    %v340 = vshrl.u32 %v339, 7
    %v341 = vsub.s32 0, %v340
    %v342 = vrot.slane %v338, %v341
    %v343 = vmul.f32 %v47, %v321
    %v344 = vlaneseq
    %v345 = vshrl.u32 %v344, 7
    %v346 = vsub.s32 0, %v345
    %v347 = vrot.slane %v343, %v346
    %v348 = vmul.f32 %v43, %v217
    %v349 = vlaneseq
    %v350 = vshrl.u32 %v349, 7
    %v351 = vsub.s32 0, %v350
    %v352 = vrot.slane %v348, %v351
    %v353 = vmul.f32 %v43, %v321
    %v354 = vlaneseq
    %v355 = vshrl.u32 %v354, 7
    %v356 = vsub.s32 0, %v355
    %v357 = vrot.slane %v353, %v356
    %v358 = vlaneseq
    %v359 = vshrl.u32 %v358, 7
    %vm360 = vcmp.ge.s32.totalorder %v359, 1
    %vm361 = vcmp.le.s32.totalorder %v359, 4
    %vm362 = vmand %vm360, %vm361
    %v363 = vsel %vm362, 1.0, -1.0
    %v364 = vand.u32 %v359, 2
    %vm365 = vcmp.ne.s32.totalorder %v364, 0
    %v366 = vsel %vm365, 1.0, -1.0
    %vm367 = vcmp.ge.s32.totalorder %v359, 3
    %vm368 = vcmp.le.s32.totalorder %v359, 6
    %vm369 = vmand %vm367, %vm368
    %v370 = vsel %vm369, 1.0, -1.0
    %v371 = vmul.f32 %v370, %v342
    %v372 = vadd.f32 %v325, %v371
    %v373 = vmul.f32 %v363, %v357
    %v374 = vadd.f32 %v372, %v373
    %v375 = vmul.f32 %v366, %v337
    %v376 = vadd.f32 %v329, %v375
    %v377 = vmul.f32 %v370, %v347
    %v378 = vsub.f32 %v333, %v377
    %v379 = vmul.f32 %v363, %v352
    %v380 = vadd.f32 %v378, %v379
    %381 = vst [vmem:[#allocation7] sm:$0xff] %v374
    %s382 = scalar_lea.vmem [#allocation7], 8
    %383 = vst [vmem:[%s382] sm:$0xff] %v376
    %s384 = scalar_lea.vmem [#allocation7], 16
    %385 = vst [vmem:[%s384] sm:$0xff] %v380
    %v386 = vstv %s49
    %v387 = vmul.f32 %v386, %v374
    %v388 = vstv %s50
    %v389 = vmul.f32 %v388, %v376
    %v390 = vadd.f32 %v387, %v389
    %v391 = vstv %s51
    %v392 = vmul.f32 %v391, %v380
    %v393 = vadd.f32 %v390, %v392
    %v394 = vstv %s52
    %v395 = vadd.f32 %v393, %v394
    %v396 = vstv %s53
    %v397 = vmul.f32 %v396, %v374
    %v398 = vstv %s54
    %v399 = vmul.f32 %v398, %v376
    %v400 = vadd.f32 %v397, %v399
    %v401 = vstv %s55
    %v402 = vmul.f32 %v401, %v380
    %v403 = vadd.f32 %v400, %v402
    %v404 = vstv %s56
    %v405 = vadd.f32 %v403, %v404
    %v406 = vstv %s57
    %v407 = vmul.f32 %v406, %v374
    %v408 = vstv %s58
    %v409 = vmul.f32 %v408, %v376
    %v410 = vadd.f32 %v407, %v409
    %v411 = vstv %s59
    %v412 = vmul.f32 %v411, %v380
    %v413 = vadd.f32 %v410, %v412
    %v414 = vstv %s60
    %v415 = vadd.f32 %v413, %v414
    %v416 = vadd.f32 %v415, 1e-06
    %v417 = vrcp.pop %v416
    %v418 = vmul.f32 %v416, %v417
    %v419 = vsub.f32 2.0, %v418
    %v420 = vmul.f32 %v417, %v419
    %v421 = vmul.f32 %v395, %v420
    %422 = vst [vmem:[#allocation8] sm:$0xff] %v421
    %v423 = vmul.f32 %v405, %v420
    %s424 = scalar_lea.vmem [#allocation8], 8
    %425 = vst [vmem:[%s424] sm:$0xff] %v423
    %v426 = vmul.f32 %v415, %v420
    %s427 = scalar_lea.vmem [#allocation8], 16
    %428 = vst [vmem:[%s427] sm:$0xff] %v426
    %429 = vst [vmem:[#allocation10] sm:$0x1] %v114
    // Predicated region
    $region18: #{tpu_custom_call.1} parent=1 // pred_check
      _
    $region19: #{tpu_custom_call.1} parent=1 // pred_check_branch
      %431 = sbr.rel (0) target = $region21
    $region20: #{tpu_custom_call.1} parent=1 // pred_region
      %s433 = ssub.s32 384, 384
      %434 = vsyncadd [#allocation4], %s433
      %s435 = sshll.u32 [#allocation7], 4
      %s436 = int_to_ptr.vmem [resolvable:$true] %s435
      %441 = dma.vmem_to_hbm [thread:$0]  %s436, 384, %s2, [#allocation4], 128, 128, 8
    $region21: #{tpu_custom_call.1} parent=1 // pred_fallthru
      _
    // Predicated region
    $region22: #{tpu_custom_call.1} parent=1 // pred_check
      _
    $region23: #{tpu_custom_call.1} parent=1 // pred_check_branch
      %443 = sbr.rel (0) target = $region25
    $region24: #{tpu_custom_call.1} parent=1 // pred_region
      %s445 = ssub.s32 384, 384
      %446 = vsyncadd [#allocation9], %s445
      %s447 = sshll.u32 [#allocation8], 4
      %s448 = int_to_ptr.vmem [resolvable:$true] %s447
      %453 = dma.vmem_to_hbm [thread:$0]  %s448, 384, %s3, [#allocation9], 128, 128, 8
    $region25: #{tpu_custom_call.1} parent=1 // pred_fallthru
      _
    // Predicated region
    $region26: #{tpu_custom_call.1} parent=1 // pred_check
      _
    $region27: #{tpu_custom_call.1} parent=1 // pred_check_branch
      %455 = sbr.rel (0) target = $region29
    $region28: #{tpu_custom_call.1} parent=1 // pred_region
      %s457 = ssub.s32 16, 16
      %458 = vsyncadd [#allocation9], %s457
      %s460 = sshll.u32 [#allocation10], 4
      %s461 = int_to_ptr.vmem [resolvable:$true] %s460
      %463 = dma.vmem_to_hbm [thread:$0]  %s461, 16, %s4, [#allocation9]
    $region29: #{tpu_custom_call.1} parent=1 // pred_fallthru
      _
    // Predicated region
    $region30: #{tpu_custom_call.1} parent=1 // pred_check
      _
    $region31: #{tpu_custom_call.1} parent=1 // pred_check_branch
      %465 = sbr.rel (0) target = $region33
    $region32: #{tpu_custom_call.1} parent=1 // pred_region
      %466 = dma.done [#allocation4], 384
    $region33: #{tpu_custom_call.1} parent=1 // pred_fallthru
      _
    // Predicated region
    $region34: #{tpu_custom_call.1} parent=1 // pred_check
      _
    $region35: #{tpu_custom_call.1} parent=1 // pred_check_branch
      %468 = sbr.rel (0) target = $region37
    $region36: #{tpu_custom_call.1} parent=1 // pred_region
      %469 = dma.done [#allocation9], 384
    $region37: #{tpu_custom_call.1} parent=1 // pred_fallthru
      _
    // Predicated region
    $region38: #{tpu_custom_call.1} parent=1 // pred_check
      _
    $region39: #{tpu_custom_call.1} parent=1 // pred_check_branch
      %471 = sbr.rel (0) target = $region41
    $region40: #{tpu_custom_call.1} parent=1 // pred_region
      %472 = dma.done [#allocation9], 16
    $region41: #{tpu_custom_call.1} parent=1 // pred_fallthru
      _
    %473 = vsyncpa [#allocation3], 1
    %474 = vsyncpa [#allocation4], 1
    %475 = vsyncpa [#allocation9], 1
    %476 = vsyncpa [#allocation5], 1

</llo_original>
